<compile_context>
chip_gen: v6e
topology: v6e:2x2x1
jax: 0.10.0
libtpu: 0.0.40
codegen_flags: <defaults>
</compile_context>

<pallas_src>
import jax
import jax.numpy as jnp
from jax.experimental import pallas as pl
from jax.experimental.pallas import tpu as pltpu


def highway_kernel(x_ref, w_ref, b_ref, o_ref):
    x = x_ref[...]                                   # (TM, E), f32 or bf16
    E = x.shape[-1]

    # Single fused MXU matmul: (TM, E) @ (E, 2E) -> (TM, 2E), f32 accumulation.
    # Cast activations to the (possibly bf16) weight dtype for the MXU only.
    z = jnp.dot(x.astype(w_ref.dtype), w_ref[...],
                preferred_element_type=jnp.float32) + b_ref[...]

    # Split fused result: first E columns = projection branch, last E = gate.
    proj = jnp.maximum(z[:, :E], 0.0)                # relu, f32 (VPU)
    gate = jax.nn.sigmoid(z[:, E:])                  # sigmoid, f32 (EUP)

    # Highway combine in f32: x + g*(proj - x) == g*proj + (1-g)*x, one fewer mul.
    xf = x.astype(jnp.float32)
    o_ref[...] = (xf + gate * (proj - xf)).astype(o_ref.dtype)


def fuse_highway_params(w_proj, b_proj, w_gate, b_gate, *, mxu_dtype=None):
    """Fuse projection/gate Linear params ONCE (call at init time, not per step).

    w_*: (E, E) laid out so y = x @ w + b (i.e. torch weight transposed).
    Returns (w_cat: (E, 2E), b_cat: (1, 2E)); optionally casts weights to
    mxu_dtype (e.g. jnp.bfloat16) for the fast MXU path on v6e/v7x.
    """
    E = w_proj.shape[0]
    w_cat = jnp.concatenate([w_proj, w_gate], axis=1)            # (E, 2E)
    b_cat = jnp.concatenate([b_proj, b_gate]).reshape(1, 2 * E)  # (1, 2E)
    if mxu_dtype is not None:
        w_cat = w_cat.astype(mxu_dtype)
    return w_cat, b_cat


def _pick_row_tile(batch, *, cap=512, min_tile=8, target_steps=4):
    """Fixed power-of-two row tile; halved until there are >= target_steps grid
    steps (>= 2 per TensorCore on v7x) or we hit the 8-sublane minimum.  The
    partial last block (batch % tm != 0) is masked on store by Pallas."""
    tm = cap
    while tm > min_tile and pl.cdiv(batch, tm) < target_steps:
        tm //= 2
    return max(min_tile, tm)


def highway_forward(x, w_cat, b_cat, *, out_dtype=None, interpret=False):
    """x: (B, E); w_cat: (E, 2E); b_cat: (1, 2E) (from fuse_highway_params).

    Output dtype defaults to x.dtype, so a bf16 x gives bf16 I/O (half the
    activation HBM traffic) while all math stays f32-accumulated.
    """
    B, E = x.shape
    assert w_cat.shape == (E, 2 * E), w_cat.shape
    assert b_cat.shape == (1, 2 * E), b_cat.shape
    out_dtype = x.dtype if out_dtype is None else jnp.dtype(out_dtype)

    tm = _pick_row_tile(B)
    grid = (pl.cdiv(B, tm),)          # partial last block masked on store

    # --- VMEM budget (generation-aware): double-buffered x/out tiles +
    # resident fused weight/bias (+ f32 intermediate), capped at v7x's 64 MiB.
    x_bytes = tm * E * x.dtype.itemsize
    o_bytes = tm * E * out_dtype.itemsize
    w_bytes = w_cat.size * w_cat.dtype.itemsize
    b_bytes = b_cat.size * b_cat.dtype.itemsize
    z_bytes = tm * 2 * E * 4
    vmem_needed = 2 * (x_bytes + o_bytes) + 2 * (w_bytes + b_bytes) + 2 * z_bytes
    vmem_limit = int(min(max(2 * vmem_needed, 16 * 1024 * 1024),
                         64 * 1024 * 1024))

    cost = pl.CostEstimate(
        flops=2 * B * E * (2 * E),
        transcendentals=B * E,                       # sigmoid
        bytes_accessed=B * E * (x.dtype.itemsize + out_dtype.itemsize)
                       + w_bytes + b_bytes,
    )

    # TODO(synk): for E large enough that the fused (E, 2E) weight can't stay
    # resident (esp. v7x's 64 MiB VMEM), add a K-tiled path: grid=(B//TM, E//TK)
    # with an f32 VMEM accumulator scratch, reduction axis last + "arbitrary",
    # TK/TN multiples of 256 on v6e/v7x and 128 on v5e.
    return pl.pallas_call(
        highway_kernel,
        out_shape=jax.ShapeDtypeStruct((B, E), out_dtype),
        grid=grid,
        in_specs=[
            pl.BlockSpec((tm, E), lambda i: (i, 0)),      # x: tiled over batch
            pl.BlockSpec((E, 2 * E), lambda i: (0, 0)),   # fused weight: resident
            pl.BlockSpec((1, 2 * E), lambda i: (0, 0)),   # fused bias: resident
        ],
        out_specs=pl.BlockSpec((tm, E), lambda i: (i, 0)),
        compiler_params=pltpu.CompilerParams(
            dimension_semantics=("parallel",),
            vmem_limit_bytes=vmem_limit,
        ),
        cost_estimate=cost,
        interpret=interpret,
    )(x, w_cat, b_cat)


def reference_forward(x, w_proj, b_proj, w_gate, b_gate):
    proj = jax.nn.relu(x @ w_proj + b_proj)
    gate = jax.nn.sigmoid(x @ w_gate + b_gate)
    return gate * proj + (1.0 - gate) * x


if __name__ == "__main__":
    key = jax.random.PRNGKey(0)

    def init_params(k, E):
        kwp, kbp, kwg, kbg = jax.random.split(k, 4)
        bound = 1.0 / jnp.sqrt(E)
        w_proj = jax.random.uniform(kwp, (E, E), jnp.float32, -bound, bound)
        b_proj = jax.random.uniform(kbp, (E,), jnp.float32, -bound, bound)
        w_gate = jax.random.uniform(kwg, (E, E), jnp.float32, -bound, bound)
        b_gate = jax.random.uniform(kbg, (E,), jnp.float32, -bound, bound)
        return w_proj, b_proj, w_gate, b_gate

    # --- Case 1: module-default style shape (B=8, E=64), f32 end-to-end. ----
    kx, kp, key = jax.random.split(key, 3)
    B, E = 8, 64
    x = jax.random.normal(kx, (B, E), dtype=jnp.float32)
    params = init_params(kp, E)
    w_cat, b_cat = fuse_highway_params(*params)       # fused ONCE, outside the call
    out = jax.block_until_ready(highway_forward(x, w_cat, b_cat))
    ref = reference_forward(x, *params)
    assert out.shape == (B, E) and out.dtype == jnp.float32
    assert jnp.allclose(out, ref, atol=1e-5, rtol=1e-5), "f32 mismatch vs reference"

    # --- Case 2: lane-dense E=128, awkward batch (masked partial last tile),
    #             bf16 weights on the MXU, f32 activations. ------------------
    kx2, kp2, key = jax.random.split(key, 3)
    B2, E2 = 50, 128
    x2 = jax.random.normal(kx2, (B2, E2), dtype=jnp.float32)
    params2 = init_params(kp2, E2)
    w_cat2, b_cat2 = fuse_highway_params(*params2, mxu_dtype=jnp.bfloat16)
    out2 = jax.block_until_ready(highway_forward(x2, w_cat2, b_cat2))
    ref2 = reference_forward(x2, *params2)
    assert out2.shape == (B2, E2)
    assert jnp.allclose(out2, ref2, atol=5e-2, rtol=5e-2), "bf16-weight mismatch"

    # --- Case 3: bf16 activation I/O (halves x/out HBM bytes), f32 epilogue. -
    x3 = x2.astype(jnp.bfloat16)
    out3 = jax.block_until_ready(highway_forward(x3, w_cat2, b_cat2))
    ref3 = reference_forward(x3.astype(jnp.float32), *params2)
    assert out3.dtype == jnp.bfloat16
    assert jnp.allclose(out3.astype(jnp.float32), ref3, atol=7e-2, rtol=7e-2), \
        "bf16-activation mismatch"

    print("KERNEL_OK")
</pallas_src>

<mosaic_0001>
module attributes {stable_mosaic.version = 11 : i64} {
  func.func @highway_kernel(%arg0: i32, %arg1: memref<8x64xf32, #tpu.memory_space<vmem>>, %arg2: memref<64x128xf32, #tpu.memory_space<vmem>>, %arg3: memref<1x128xf32, #tpu.memory_space<vmem>>, %arg4: memref<8x64xf32, #tpu.memory_space<vmem>>) attributes {dimension_semantics = [#tpu.dimension_semantics<parallel>], iteration_bounds = array<i64: 1>, scalar_prefetch = 0 : i64, scratch_operands = 0 : i64, tpu.core_type = #tpu.core_type<tc>, window_params = [{transform_indices = @transform_0, window_bounds = array<i64: 8, 64>}, {pipeline_mode = #tpu.pipeline_mode<synchronous>, transform_indices = @transform_1, window_bounds = array<i64: 64, 128>}, {pipeline_mode = #tpu.pipeline_mode<synchronous>, transform_indices = @transform_2, window_bounds = array<i64: 1, 128>}, {transform_indices = @transform_3, window_bounds = array<i64: 8, 64>}]} {
    %c0 = arith.constant 0 : index
    %c0_0 = arith.constant 0 : index
    %0 = vector.load %arg1[%c0, %c0_0] : memref<8x64xf32, #tpu.memory_space<vmem>>, vector<8x64xf32>
    %c0_1 = arith.constant 0 : index
    %c0_2 = arith.constant 0 : index
    %1 = vector.load %arg2[%c0_1, %c0_2] : memref<64x128xf32, #tpu.memory_space<vmem>>, vector<64x128xf32>
    %cst = arith.constant dense<0.000000e+00> : vector<8x128xf32>
    %2 = tpu.matmul %0, %1, %cst {dimension_numbers = #tpu.dot_dimension_numbers<[1], [0], [0], [1], [0, 0, 1, 1], [], []>} : vector<8x64xf32>, vector<64x128xf32>, vector<8x128xf32> -> vector<8x128xf32>
    %c0_3 = arith.constant 0 : index
    %c0_4 = arith.constant 0 : index
    %3 = vector.load %arg3[%c0_3, %c0_4] : memref<1x128xf32, #tpu.memory_space<vmem>>, vector<1x128xf32>
    %4 = vector.broadcast %3 : vector<1x128xf32> to vector<8x128xf32>
    %5 = arith.addf %2, %4 : vector<8x128xf32>
    %6 = vector.extract_strided_slice %5 {offsets = [0, 0], sizes = [8, 64], strides = [1, 1]} : vector<8x128xf32> to vector<8x64xf32>
    %cst_5 = arith.constant 0.000000e+00 : f32
    %7 = vector.broadcast %cst_5 : f32 to vector<8x64xf32>
    %8 = arith.maximumf %6, %7 : vector<8x64xf32>
    %9 = vector.extract_strided_slice %5 {offsets = [0, 64], sizes = [8, 64], strides = [1, 1]} : vector<8x128xf32> to vector<8x64xf32>
    %10 = arith.negf %9 : vector<8x64xf32>
    %11 = math.exp %10 : vector<8x64xf32>
    %cst_6 = arith.constant 1.000000e+00 : f32
    %12 = vector.broadcast %cst_6 : f32 to vector<8x64xf32>
    %13 = arith.addf %12, %11 : vector<8x64xf32>
    %14 = arith.divf %12, %13 : vector<8x64xf32>
    %15 = arith.subf %8, %0 : vector<8x64xf32>
    %16 = arith.mulf %14, %15 : vector<8x64xf32>
    %17 = arith.addf %0, %16 : vector<8x64xf32>
    %c0_7 = arith.constant 0 : index
    %c0_8 = arith.constant 0 : index
    %18 = vector.load %arg4[%c0_7, %c0_8] : memref<8x64xf32, #tpu.memory_space<vmem>>, vector<8x64xf32>
    tpu.vector_store %arg4[%c0_7, %c0_8], %17 {strides = array<i32>} : memref<8x64xf32, #tpu.memory_space<vmem>>, vector<8x64xf32>,
    return
  }
  func.func @transform_0(%arg0: i32) -> (i32, i32) {
    %c0_i32 = arith.constant 0 : i32
    %c0_i32_0 = arith.constant 0 : i32
    return %arg0, %c0_i32 : i32, i32
  }
  func.func @transform_1(%arg0: i32) -> (i32, i32) {
    %c0_i32 = arith.constant 0 : i32
    %c0_i32_0 = arith.constant 0 : i32
    %c0_i32_1 = arith.constant 0 : i32
    return %c0_i32, %c0_i32_0 : i32, i32
  }
  func.func @transform_2(%arg0: i32) -> (i32, i32) {
    %c0_i32 = arith.constant 0 : i32
    %c0_i32_0 = arith.constant 0 : i32
    %c0_i32_1 = arith.constant 0 : i32
    return %c0_i32, %c0_i32_0 : i32, i32
  }
  func.func @transform_3(%arg0: i32) -> (i32, i32) {
    %c0_i32 = arith.constant 0 : i32
    %c0_i32_0 = arith.constant 0 : i32
    return %arg0, %c0_i32 : i32, i32
  }
}

</mosaic_0001>

<llo_original>
// kernel: tpu_custom_call.1
$region0: #{tpu_custom_call.1}
  #allocation0 [shape = 'u32[]', space=smem, size = 0x4, offset = 0x4, fixed_abs, tag = 'smem constant byte address 0x4 - core index']
  #allocation1 [shape = 'u32[144,128]{1,0:T(1,128)}', space=vmem, size = 0x12000, scoped, tag = 'internal scratch']
  %s0 = inlined_call_operand.hbm [shape: f32[8,64], index: 0, kind: input, shape index: {}]
  %s1 = inlined_call_operand.hbm [shape: f32[64,128], index: 1, kind: input, shape index: {}]
  %s2 = inlined_call_operand.vmem [shape: f32[1,128], index: 2, kind: input, shape index: {}]
  %s3 = inlined_call_operand.hbm [shape: f32[8,64], index: 3, kind: output, shape index: {}]
  %s4 = sld [smem:[#allocation0]]
  $region30: #{tpu_custom_call.1} parent=0
    _
  %s6 = ssub.s32 1, %s4
  %s7 = scalar_select 0, %s6, %s4
  $region1: #{tpu_custom_call.1} parent=0
    #allocation2 [shape = 'u8[4096]{0}', space=vmem, size = 0x1000, scoped, tag = 'input window, operand 0, single buffered']
    #allocation3 [shape = 's32[1]{0}', space=sflag, size = 0x4, scoped, tag = 'scoped memory for tpu_custom_call.1']
    #allocation4 [shape = 's32[1]{0}', space=sflag, size = 0x4, scoped, tag = 'scoped memory for tpu_custom_call.1']
    #allocation5 [shape = 'u8[32768]{0}', space=vmem, size = 0x8000, scoped, tag = 'input window, operand 1, single buffered']
    #allocation6 [shape = 's32[1]{0}', space=sflag, size = 0x4, scoped, tag = 'scoped memory for tpu_custom_call.1']
    #allocation7 [shape = 'u8[4096]{0}', space=vmem, size = 0x1000, scoped, tag = 'output window, operand 0, single buffered']
    %8 = vsyncpa [#allocation3], 0
    %9 = vsyncpa [#allocation6], 0
    %10 = vsyncpa [#allocation4], 0
    // Predicated region
    $region2: #{tpu_custom_call.1} parent=1 // pred_check
      _
    $region3: #{tpu_custom_call.1} parent=1 // pred_check_branch
      %12 = sbr.rel (0) target = $region5
    $region4: #{tpu_custom_call.1} parent=1 // pred_region
      %s14 = ssub.s32 128, 128
      %15 = vsyncadd [#allocation3], %s14
      %s17 = sshll.u32 [#allocation2], 4
      %s18 = int_to_ptr.vmem [resolvable:$true] %s17
      %20 = dma.hbm_to_vmem [thread:$0]  %s0, 128, %s18, [#allocation3]
    $region5: #{tpu_custom_call.1} parent=1 // pred_fallthru
      _
    // Predicated region
    $region6: #{tpu_custom_call.1} parent=1 // pred_check
      _
    $region7: #{tpu_custom_call.1} parent=1 // pred_check_branch
      %22 = sbr.rel (0) target = $region9
    $region8: #{tpu_custom_call.1} parent=1 // pred_region
      %s24 = ssub.s32 1024, 1024
      %25 = vsyncadd [#allocation6], %s24
      %s26 = sshll.u32 [#allocation5], 4
      %s27 = int_to_ptr.vmem [resolvable:$true] %s26
      %32 = dma.hbm_to_vmem [thread:$0]  %s1, 1024, %s27, [#allocation6], 128, 128, 8
    $region9: #{tpu_custom_call.1} parent=1 // pred_fallthru
      _
    // Predicated region
    $region10: #{tpu_custom_call.1} parent=1 // pred_check
      _
    $region11: #{tpu_custom_call.1} parent=1 // pred_check_branch
      %34 = sbr.rel (0) target = $region13
    $region12: #{tpu_custom_call.1} parent=1 // pred_region
      _
    $region13: #{tpu_custom_call.1} parent=1 // pred_fallthru
      _
    // Predicated region
    $region14: #{tpu_custom_call.1} parent=1 // pred_check
      _
    $region15: #{tpu_custom_call.1} parent=1 // pred_check_branch
      %36 = sbr.rel (0) target = $region17
    $region16: #{tpu_custom_call.1} parent=1 // pred_region
      %37 = dma.done [#allocation3], 128
    $region17: #{tpu_custom_call.1} parent=1 // pred_fallthru
      _
    // Predicated region
    $region18: #{tpu_custom_call.1} parent=1 // pred_check
      _
    $region19: #{tpu_custom_call.1} parent=1 // pred_check_branch
      %39 = sbr.rel (0) target = $region21
    $region20: #{tpu_custom_call.1} parent=1 // pred_region
      %40 = dma.done [#allocation6], 1024
    $region21: #{tpu_custom_call.1} parent=1 // pred_fallthru
      _
    %v41 = vld [vmem:[#allocation2] sm:$0xff]
    %v42 = vld [vmem:[#allocation5] sm:$0xff]
    %v43 = vld [vmem:[#allocation5 + $0x8] sm:$0xff]
    %v44 = vld [vmem:[#allocation5 + $0x10] sm:$0xff]
    %v45 = vld [vmem:[#allocation5 + $0x18] sm:$0xff]
    %v46 = vld [vmem:[#allocation5 + $0x20] sm:$0xff]
    %v47 = vld [vmem:[#allocation5 + $0x28] sm:$0xff]
    %v48 = vld [vmem:[#allocation5 + $0x30] sm:$0xff]
    %v49 = vld [vmem:[#allocation5 + $0x38] sm:$0xff]
    %v50 = vld [vmem:[%s2] sm:$0x1]
    %v52 = vlaneseq
    %v53 = vshrl.u32 %v52, 7
    %v54 = vsub.s32 0, %v53
    %v55 = vrot.slane %v50, %v54
    %vm57 = vcmask 523264
    %v59 = vsel %vm57, %v41, 0
    %61 = vmatprep.subr.mxu0 0.0
    %62 = vmatpush1.msra.mxu0 0.0
    %63 = vmatprep.subr.mxu0 0.0
    %64 = vmatpush1.msra.mxu0 0.0
    %65 = vmatprep.subr.mxu0 0.0
    %66 = vmatpush1.msra.mxu0 0.0
    %67 = vmatprep.subr.mxu0 0.0
    %68 = vmatpush1.msra.mxu0 0.0
    %69 = vmatprep.subr.mxu0 0.0
    %70 = vmatpush1.msra.mxu0 0.0
    %71 = vmatprep.subr.mxu0 0.0
    %72 = vmatpush1.msra.mxu0 0.0
    %73 = vmatprep.subr.mxu0 0.0
    %74 = vmatpush1.msra.mxu0 0.0
    %75 = vmatprep.subr.mxu0 0.0
    %76 = vmatpush1.msra.mxu0 0.0
    %77 = vmatprep.subr.mxu0 0.0
    %78 = vmatpush1.msra.mxu0 %v49
    %79 = vmatprep.subr.mxu0 0.0
    %80 = vmatpush1.msra.mxu0 %v48
    %81 = vmatprep.subr.mxu0 0.0
    %82 = vmatpush1.msra.mxu0 %v47
    %83 = vmatprep.subr.mxu0 0.0
    %84 = vmatpush1.msra.mxu0 %v46
    %85 = vmatprep.subr.mxu0 0.0
    %86 = vmatpush1.msra.mxu0 %v45
    %87 = vmatprep.subr.mxu0 0.0
    %88 = vmatpush1.msra.mxu0 %v44
    %89 = vmatprep.subr.mxu0 0.0
    %90 = vmatpush1.msra.mxu0 %v43
    %91 = vmatprep.subr.mxu0 0.0
    %92 = vmatpush1.msra.mxu0 %v42
    %93 = vmatprep.subr.mxu0 0.0
    %94 = vmatpush2.msra.mxu0 0.0
    %95 = vmatprep.subr.mxu0 0.0
    %96 = vmatpush2.msra.mxu0 0.0
    %97 = vmatprep.subr.mxu0 0.0
    %98 = vmatpush2.msra.mxu0 0.0
    %99 = vmatprep.subr.mxu0 0.0
    %100 = vmatpush2.msra.mxu0 0.0
    %101 = vmatprep.subr.mxu0 0.0
    %102 = vmatpush2.msra.mxu0 0.0
    %103 = vmatprep.subr.mxu0 0.0
    %104 = vmatpush2.msra.mxu0 0.0
    %105 = vmatprep.subr.mxu0 0.0
    %106 = vmatpush2.msra.mxu0 0.0
    %107 = vmatprep.subr.mxu0 0.0
    %108 = vmatpush2.msra.mxu0 0.0
    %109 = vmatprep.subr.mxu0 0.0
    %110 = vmatpush2.msra.mxu0 0.0
    %111 = vmatprep.subr.mxu0 0.0
    %112 = vmatpush2.msra.mxu0 0.0
    %113 = vmatprep.subr.mxu0 0.0
    %114 = vmatpush2.msra.mxu0 0.0
    %115 = vmatprep.subr.mxu0 0.0
    %116 = vmatpush2.msra.mxu0 0.0
    %117 = vmatprep.subr.mxu0 0.0
    %118 = vmatpush2.msra.mxu0 0.0
    %119 = vmatprep.subr.mxu0 0.0
    %120 = vmatpush2.msra.mxu0 0.0
    %121 = vmatprep.subr.mxu0 0.0
    %122 = vmatpush2.msra.mxu0 0.0
    %123 = vmatprep.subr.mxu0 0.0
    %124 = vmatpush2.msra.mxu0 0.0
    %125 = vmatprep.mubr.f32.mxu0 0.0
    %126 = vmatmul.mubr.f32.gmra.mxu0 %v59
    %v127 = vpop.f32.mrf.mxu0
    %v128 = vadd.f32 %v55, %v127
    %v129 = vpop.f32.mrf.mxu0
    %130 = vdwg.mxu0
    %v131 = vmax.f32 %v128, 0.0
    %v132 = vxor.u32 %v128, 2147483648
    %v133 = vmul.f32 %v132, 1.442695
    %v134 = vpow.pop %v133
    %v135 = vadd.f32 %v134, 1.0
    %v136 = vrcp.pop %v135
    %v137 = vmul.f32 1.0, %v136
    %v138 = vsub.f32 %v131, %v41
    %140 = vrot.lane.b32.xlu0 %v138, 64
    %v141 = vpop.permute.xlu0 %140
    %v143 = vmul.f32 %v137, %v141
    %145 = vrot.lane.b32.xlu0 %v143, 64
    %v146 = vpop.permute.xlu0 %145
    %v148 = vadd.f32 %v41, %v146
    %149 = vst.msk [vmem:[#allocation7] sm:$0xff] %vm57, %v148
    // Predicated region
    $region22: #{tpu_custom_call.1} parent=1 // pred_check
      _
    $region23: #{tpu_custom_call.1} parent=1 // pred_check_branch
      %151 = sbr.rel (0) target = $region25
    $region24: #{tpu_custom_call.1} parent=1 // pred_region
      %s153 = ssub.s32 128, 128
      %154 = vsyncadd [#allocation4], %s153
      %s156 = sshll.u32 [#allocation7], 4
      %s157 = int_to_ptr.vmem [resolvable:$true] %s156
      %159 = dma.vmem_to_hbm [thread:$0]  %s157, 128, %s3, [#allocation4]
    $region25: #{tpu_custom_call.1} parent=1 // pred_fallthru
      _
    // Predicated region
    $region26: #{tpu_custom_call.1} parent=1 // pred_check
      _
    $region27: #{tpu_custom_call.1} parent=1 // pred_check_branch
      %161 = sbr.rel (0) target = $region29
    $region28: #{tpu_custom_call.1} parent=1 // pred_region
      %162 = dma.done [#allocation4], 128
    $region29: #{tpu_custom_call.1} parent=1 // pred_fallthru
      _
    %163 = vsyncpa [#allocation3], 1
    %164 = vsyncpa [#allocation6], 1
    %165 = vsyncpa [#allocation4], 1

</llo_original>
